<compile_context>
chip_gen: v7x
topology: tpu7x:2x2x1
jax: 0.10.0
libtpu: 0.0.40
codegen_flags: <defaults>
</compile_context>

<pallas_src>
import jax
import jax.numpy as jnp
from jax.experimental import pallas as pl
from jax.experimental.pallas import tpu as pltpu

BN_EPS = 1e-5
LRELU_SLOPE = 0.2
_LANE = 128


def _round_up(x, m):
    return (x + m - 1) // m * m


def _vmem_budgets():
    """(tile-sizing budget, scoped vmem limit) per TPU generation."""
    try:
        cap = pltpu.get_tpu_info().vmem_capacity_bytes
    except Exception:                       # query unavailable -> assume 64 MiB (v7x-safe)
        cap = 64 * 1024 * 1024
    if cap >= 100 * 1024 * 1024:            # v5e / v6e: 128 MiB per TensorCore
        return 64 * 1024 * 1024, 96 * 1024 * 1024
    return 28 * 1024 * 1024, 48 * 1024 * 1024   # v7x: 64 MiB per TensorCore


def _choose_tiles(m, tk, cout_mxu, n_k, budget):
    """M-tile, rounded to 256 (MXU height on v6e/v7x), sized against VMEM."""
    # conservative per-row VMEM (covers pass-1 and pass-2 double buffering)
    per_row = 4 * tk + 12 * cout_mxu
    fixed = 4 * tk * cout_mxu               # double-buffered bf16 weight block
    tm = max(256, (budget - fixed) // per_row)
    tm = min(tm, 4096, _round_up(m, 256))
    tm = max(256, (tm // 256) * 256)
    n_m = -(-m // tm)
    if n_m > 1 and n_m % 2 == 1:            # keep both v7x TensorCores busy
        n_m += 1
        tm = max(256, _round_up(-(-m // n_m), 256))
    m_pad = _round_up(m, tm)
    return tm, m_pad, m_pad // tm


# ---------------------------------------------------------------------------
# Kernels
# ---------------------------------------------------------------------------
def _conv_stats_kernel_nk1(p_ref, w_ref, y_ref, stats_ref):
    """Single-K-tile fast path: dot -> bf16 y + partial BN stats, no scratch."""
    cout = y_ref.shape[-1]
    acc = jnp.dot(p_ref[...], w_ref[...], preferred_element_type=jnp.float32)
    y = acc[:, :cout]                                   # stats from f32 result
    y_ref[...] = y.astype(y_ref.dtype)
    stats_ref[0, 0:1, :] = jnp.sum(y, axis=0, keepdims=True)
    stats_ref[0, 1:2, :] = jnp.sum(y * y, axis=0, keepdims=True)


def _conv_stats_kernel(p_ref, w_ref, y_ref, stats_ref, acc_ref):
    """General path: f32 VMEM accumulator over the K grid axis (P3 pattern)."""
    k = pl.program_id(1)

    @pl.when(k == 0)
    def _():
        acc_ref[...] = jnp.zeros_like(acc_ref)

    acc_ref[...] += jnp.dot(p_ref[...], w_ref[...],
                            preferred_element_type=jnp.float32)

    @pl.when(k == pl.num_programs(1) - 1)
    def _():
        cout = y_ref.shape[-1]
        y = acc_ref[:, :cout]                           # stats from the f32 acc
        y_ref[...] = y.astype(y_ref.dtype)
        stats_ref[0, 0:1, :] = jnp.sum(y, axis=0, keepdims=True)
        stats_ref[0, 1:2, :] = jnp.sum(y * y, axis=0, keepdims=True)


def _conv_only_kernel_nk1(p_ref, w_ref, y_ref):
    cout = y_ref.shape[-1]
    acc = jnp.dot(p_ref[...], w_ref[...], preferred_element_type=jnp.float32)
    y_ref[...] = acc[:, :cout].astype(y_ref.dtype)


def _conv_only_kernel(p_ref, w_ref, y_ref, acc_ref):
    k = pl.program_id(1)

    @pl.when(k == 0)
    def _():
        acc_ref[...] = jnp.zeros_like(acc_ref)

    acc_ref[...] += jnp.dot(p_ref[...], w_ref[...],
                            preferred_element_type=jnp.float32)

    @pl.when(k == pl.num_programs(1) - 1)
    def _():
        cout = y_ref.shape[-1]
        y_ref[...] = acc_ref[:, :cout].astype(y_ref.dtype)


def _bn_lrelu_kernel(y_ref, prm_ref, o_ref):
    """(y - mean) * inv_std then LeakyReLU(0.2) (single maximum); f32 on VPU."""
    y = y_ref[...].astype(jnp.float32)
    y_hat = (y - prm_ref[0:1, :]) * prm_ref[1:2, :]
    o_ref[...] = jnp.maximum(y_hat, LRELU_SLOPE * y_hat).astype(o_ref.dtype)


# ---------------------------------------------------------------------------
# Wrapper
# ---------------------------------------------------------------------------
def conv_block(x, weight, *, stride=1, conv_only=False,
               compute_dtype=jnp.bfloat16, out_dtype=jnp.float32,
               channels_last=False):
    """x: (N, Cin, H, W), weight: (Cout, Cin, KH, KW); 'valid' padding, no bias.
    Returns NCHW to match the PyTorch module; channels_last=True is the fast
    path (skips the trailing XLA transpose and returns NHWC)."""
    N, Cin, H, W = x.shape
    Cout, Cin_w, KH, KW = weight.shape
    assert Cin == Cin_w

    # --- im2col: single XLA op, NHWC, already in bf16 so the patch matrix is
    # materialized exactly once at compute precision.  Feature ordering is
    # (Cin, KH, KW), matching weight.reshape(Cout, -1).
    x_nhwc = jnp.transpose(x, (0, 2, 3, 1)).astype(compute_dtype)
    patches = jax.lax.conv_general_dilated_patches(
        x_nhwc, filter_shape=(KH, KW), window_strides=(stride, stride),
        padding="VALID", dimension_numbers=("NHWC", "HWIO", "NHWC"))
    _, OH, OW, K = patches.shape
    M = N * OH * OW
    patches = patches.reshape(M, K)
    w2d = weight.reshape(Cout, K).T.astype(compute_dtype)        # (K, Cout)

    # --- tiling -------------------------------------------------------------
    budget, vmem_limit = _vmem_budgets()
    cout_mxu = _round_up(Cout, _LANE)        # MXU / accumulator width only
    k_pad = _round_up(K, _LANE)
    tk = _LANE
    for cand in range(min(512, k_pad), _LANE - 1, -_LANE):  # largest divisor
        if k_pad % cand == 0:
            tk = cand
            break
    n_k = k_pad // tk
    tm, m_pad, n_m = _choose_tiles(M, tk, cout_mxu, n_k, budget)

    # Zero-padded M rows / K cols are matmul- and stat-neutral.
    patches_p = jnp.pad(patches, ((0, m_pad - M), (0, k_pad - K)))
    w_p = jnp.pad(w2d, ((0, k_pad - K), (0, cout_mxu - Cout)))

    params_mm = pltpu.CompilerParams(
        dimension_semantics=("parallel",) if n_k == 1
        else ("parallel", "arbitrary"),
        vmem_limit_bytes=vmem_limit)

    if n_k == 1:
        grid = (n_m,)
        p_spec = pl.BlockSpec((tm, tk), lambda i: (i, 0))
        w_spec = pl.BlockSpec((tk, cout_mxu), lambda i: (0, 0))     # resident
        y_spec = pl.BlockSpec((tm, Cout), lambda i: (i, 0))
        st_spec = pl.BlockSpec((1, 2, Cout), lambda i: (i, 0, 0))
        scratch = []
        conv_kern, fused_kern = _conv_only_kernel_nk1, _conv_stats_kernel_nk1
    else:
        grid = (n_m, n_k)
        p_spec = pl.BlockSpec((tm, tk), lambda i, k: (i, k))
        w_spec = pl.BlockSpec((tk, cout_mxu), lambda i, k: (k, 0))
        y_spec = pl.BlockSpec((tm, Cout), lambda i, k: (i, 0))      # resident over K
        st_spec = pl.BlockSpec((1, 2, Cout), lambda i, k: (i, 0, 0))
        scratch = [pltpu.VMEM((tm, cout_mxu), jnp.float32)]         # f32 acc
        conv_kern, fused_kern = _conv_only_kernel, _conv_stats_kernel

    if conv_only:
        out2d = pl.pallas_call(
            conv_kern,
            out_shape=jax.ShapeDtypeStruct((m_pad, Cout), out_dtype),
            grid_spec=pltpu.PrefetchScalarGridSpec(
                num_scalar_prefetch=0, grid=grid,
                in_specs=[p_spec, w_spec], out_specs=y_spec,
                scratch_shapes=scratch),
            compiler_params=params_mm,
        )(patches_p, w_p)
    else:
        y, stats = pl.pallas_call(
            fused_kern,
            out_shape=(jax.ShapeDtypeStruct((m_pad, Cout), compute_dtype),
                       jax.ShapeDtypeStruct((n_m, 2, Cout), jnp.float32)),
            grid_spec=pltpu.PrefetchScalarGridSpec(
                num_scalar_prefetch=0, grid=grid,
                in_specs=[p_spec, w_spec],
                out_specs=[y_spec, st_spec],
                scratch_shapes=scratch),
            compiler_params=params_mm,
        )(patches_p, w_p)

        # Finalize training-mode (biased-variance) BatchNorm stats on the tiny
        # (n_m, 2, Cout) array.  Padded rows contribute 0 to both sums; divide
        # by the true M so the statistics stay exact.  E[y^2]-E[y]^2 in f32 is
        # fine at these M; switch to per-tile shifted sums / Chan merge if
        # |mean| >> std at very large M.
        sums = jnp.sum(stats[:, 0, :], axis=0)
        sumsq = jnp.sum(stats[:, 1, :], axis=0)
        mean = sums / M
        var = jnp.maximum(sumsq / M - mean * mean, 0.0)
        bn_params = jnp.stack([mean, jax.lax.rsqrt(var + BN_EPS)], axis=0)

        out2d = pl.pallas_call(
            _bn_lrelu_kernel,
            out_shape=jax.ShapeDtypeStruct((m_pad, Cout), out_dtype),
            grid_spec=pltpu.PrefetchScalarGridSpec(
                num_scalar_prefetch=0, grid=(n_m,),
                in_specs=[pl.BlockSpec((tm, Cout), lambda i: (i, 0)),
                          pl.BlockSpec((2, Cout), lambda i: (0, 0))],  # resident
                out_specs=pl.BlockSpec((tm, Cout), lambda i: (i, 0))),
            compiler_params=pltpu.CompilerParams(
                dimension_semantics=("parallel",),
                vmem_limit_bytes=vmem_limit),
        )(y, bn_params)

    out = out2d[:M].reshape(N, OH, OW, Cout)
    if channels_last:
        return out
    # TODO(synk): fold this layout change into pass 2 (in-kernel XLU transpose)
    return jnp.transpose(out, (0, 3, 1, 2))   # NCHW to match the PyTorch spec


# ---------------------------------------------------------------------------
# Pure-JAX reference (PyTorch ConvBlock.forward, training mode)
# ---------------------------------------------------------------------------
def _reference(x, weight, *, stride=1, conv_only=False):
    y = jax.lax.conv_general_dilated(
        x.astype(jnp.float32), weight.astype(jnp.float32),
        window_strides=(stride, stride), padding="VALID",
        dimension_numbers=("NCHW", "OIHW", "NCHW"))
    if conv_only:
        return y
    mean = jnp.mean(y, axis=(0, 2, 3), keepdims=True)
    var = jnp.mean((y - mean) ** 2, axis=(0, 2, 3), keepdims=True)
    y = (y - mean) * jax.lax.rsqrt(var + BN_EPS)
    return jnp.where(y >= 0.0, y, LRELU_SLOPE * y)


if __name__ == "__main__":
    # ConvBlock(in_dim=4, out_dim=8, kernel_size=3, stride=1, padding='valid')
    N, Cin, H, W = 2, 4, 16, 16
    Cout, Ksz, stride = 8, 3, 1

    key = jax.random.PRNGKey(0)
    kx, kw = jax.random.split(key)
    x = jax.random.normal(kx, (N, Cin, H, W), dtype=jnp.float32)
    fan_in = Cin * Ksz * Ksz
    weight = jax.random.normal(kw, (Cout, Cin, Ksz, Ksz),
                               dtype=jnp.float32) * (2.0 / fan_in) ** 0.5

    ref = _reference(x, weight, stride=stride)

    # Fused Conv + BN + LeakyReLU (bf16 MXU inputs / bf16 y, f32 acc + BN math).
    out = jax.block_until_ready(conv_block(x, weight, stride=stride))
    assert out.shape == (N, Cout, H - Ksz + 1, W - Ksz + 1)
    # Tolerance loosened vs the f32 reference: bf16 MXU inputs + bf16 y tile.
    assert jnp.allclose(out, ref, atol=5e-2, rtol=5e-2)

    # conv_only path.
    ref_c = _reference(x, weight, stride=stride, conv_only=True)
    out_c = jax.block_until_ready(
        conv_block(x, weight, stride=stride, conv_only=True))
    assert jnp.allclose(out_c, ref_c, atol=5e-2, rtol=5e-2)

    print("KERNEL_OK")
</pallas_src>

<mosaic_0001>
module attributes {stable_mosaic.version = 11 : i64} {
  func.func @_conv_stats_kernel_nk1(%arg0: i32, %arg1: memref<512x128xbf16, #tpu.memory_space<vmem>>, %arg2: memref<128x128xbf16, #tpu.memory_space<vmem>>, %arg3: memref<512x8xbf16, #tpu.memory_space<vmem>>, %arg4: memref<1x2x8xf32, #tpu.memory_space<vmem>>) attributes {dimension_semantics = [#tpu.dimension_semantics<parallel>], iteration_bounds = array<i64: 1>, scalar_prefetch = 0 : i64, scratch_operands = 0 : i64, tpu.core_type = #tpu.core_type<tc>, window_params = [{transform_indices = @transform_0, window_bounds = array<i64: 512, 128>}, {pipeline_mode = #tpu.pipeline_mode<synchronous>, transform_indices = @transform_1, window_bounds = array<i64: 128, 128>}, {transform_indices = @transform_2, window_bounds = array<i64: 512, 8>}, {transform_indices = @transform_3, window_bounds = array<i64: 1, 2, 8>}]} {
    %c0 = arith.constant 0 : index
    %c0_0 = arith.constant 0 : index
    %0 = vector.load %arg1[%c0, %c0_0] : memref<512x128xbf16, #tpu.memory_space<vmem>>, vector<512x128xbf16>
    %c0_1 = arith.constant 0 : index
    %c0_2 = arith.constant 0 : index
    %1 = vector.load %arg2[%c0_1, %c0_2] : memref<128x128xbf16, #tpu.memory_space<vmem>>, vector<128x128xbf16>
    %cst = arith.constant dense<0.000000e+00> : vector<512x128xf32>
    %2 = tpu.matmul %0, %1, %cst {dimension_numbers = #tpu.dot_dimension_numbers<[1], [0], [0], [1], [0, 0, 1, 1], [], []>} : vector<512x128xbf16>, vector<128x128xbf16>, vector<512x128xf32> -> vector<512x128xf32>
    %3 = vector.extract_strided_slice %2 {offsets = [0, 0], sizes = [512, 8], strides = [1, 1]} : vector<512x128xf32> to vector<512x8xf32>
    %4 = arith.truncf %3 : vector<512x8xf32> to vector<512x8xbf16>
    %c0_3 = arith.constant 0 : index
    %c0_4 = arith.constant 0 : index
    %5 = vector.load %arg3[%c0_3, %c0_4] : memref<512x8xbf16, #tpu.memory_space<vmem>>, vector<512x8xbf16>
    tpu.vector_store %arg3[%c0_3, %c0_4], %4 {strides = array<i32>} : memref<512x8xbf16, #tpu.memory_space<vmem>>, vector<512x8xbf16>,
    %cst_5 = arith.constant dense<0.000000e+00> : vector<8xf32>
    %6 = vector.multi_reduction <add>, %3, %cst_5 [0] : vector<512x8xf32> to vector<8xf32>
    %7 = vector.shape_cast %6 : vector<8xf32> to vector<1x8xf32>
    %c0_6 = arith.constant 0 : index
    %c0_7 = arith.constant 0 : index
    %c0_8 = arith.constant 0 : index
    %8 = vector.load %arg4[%c0_6, %c0_7, %c0_8] : memref<1x2x8xf32, #tpu.memory_space<vmem>>, vector<1x1x8xf32>
    %9 = vector.shape_cast %8 : vector<1x1x8xf32> to vector<1x8xf32>
    %10 = vector.shape_cast %7 : vector<1x8xf32> to vector<1x1x8xf32>
    tpu.vector_store %arg4[%c0_6, %c0_7, %c0_8], %10 {strides = array<i32>} : memref<1x2x8xf32, #tpu.memory_space<vmem>>, vector<1x1x8xf32>,
    %11 = arith.mulf %3, %3 : vector<512x8xf32>
    %cst_9 = arith.constant dense<0.000000e+00> : vector<8xf32>
    %12 = vector.multi_reduction <add>, %11, %cst_9 [0] : vector<512x8xf32> to vector<8xf32>
    %13 = vector.shape_cast %12 : vector<8xf32> to vector<1x8xf32>
    %c0_10 = arith.constant 0 : index
    %c1 = arith.constant 1 : index
    %c0_11 = arith.constant 0 : index
    %14 = vector.load %arg4[%c0_10, %c1, %c0_11] : memref<1x2x8xf32, #tpu.memory_space<vmem>>, vector<1x1x8xf32>
    %15 = vector.shape_cast %14 : vector<1x1x8xf32> to vector<1x8xf32>
    %16 = vector.shape_cast %13 : vector<1x8xf32> to vector<1x1x8xf32>
    tpu.vector_store %arg4[%c0_10, %c1, %c0_11], %16 {strides = array<i32>} : memref<1x2x8xf32, #tpu.memory_space<vmem>>, vector<1x1x8xf32>,
    return
  }
  func.func @transform_0(%arg0: i32) -> (i32, i32) {
    %c0_i32 = arith.constant 0 : i32
    %c0_i32_0 = arith.constant 0 : i32
    return %arg0, %c0_i32 : i32, i32
  }
  func.func @transform_1(%arg0: i32) -> (i32, i32) {
    %c0_i32 = arith.constant 0 : i32
    %c0_i32_0 = arith.constant 0 : i32
    %c0_i32_1 = arith.constant 0 : i32
    return %c0_i32, %c0_i32_0 : i32, i32
  }
  func.func @transform_2(%arg0: i32) -> (i32, i32) {
    %c0_i32 = arith.constant 0 : i32
    %c0_i32_0 = arith.constant 0 : i32
    return %arg0, %c0_i32 : i32, i32
  }
  func.func @transform_3(%arg0: i32) -> (i32, i32, i32) {
    %c0_i32 = arith.constant 0 : i32
    %c0_i32_0 = arith.constant 0 : i32
    %c0_i32_1 = arith.constant 0 : i32
    return %arg0, %c0_i32, %c0_i32_0 : i32, i32, i32
  }
}

</mosaic_0001>

<llo_original>
// kernel: tpu_custom_call.1
$region0: #{tpu_custom_call.1}
  #allocation0 [shape = 'u32[]', space=smem, size = 0x4, offset = 0x4, fixed_abs, tag = 'smem constant byte address 0x4 - core index']
  #allocation1 [shape = 'u32[144,128]{1,0:T(1,128)}', space=vmem, size = 0x12000, scoped, tag = 'internal scratch']
  %s0 = inlined_call_operand.hbm [shape: bf16[512,128], index: 0, kind: input, shape index: {}]
  %s1 = inlined_call_operand.hbm [shape: bf16[128,128], index: 1, kind: input, shape index: {}]
  %s2 = inlined_call_operand.vmem [shape: bf16[512,8], index: 2, kind: output, shape index: {0}]
  %s3 = inlined_call_operand.hbm [shape: f32[1,2,8], index: 3, kind: output, shape index: {1}]
  %4 = xla_tuple %s2, %s3
  %s5 = sld [smem:[#allocation0]]
  $region34: #{tpu_custom_call.1} parent=0
    _
  %s7 = ssub.s32 1, %s5
  %s8 = scalar_select 0, %s7, %s5
  $region1: #{tpu_custom_call.1} parent=0
    #allocation2 [shape = 'u8[131072]{0}', space=vmem, size = 0x20000, scoped, tag = 'input window, operand 0, single buffered']
    #allocation3 [shape = 's32[1]{0}', space=sflag, size = 0x4, scoped, tag = 'scoped memory for tpu_custom_call.1']
    #allocation4 [shape = 's32[1]{0}', space=sflag, size = 0x4, scoped, tag = 'scoped memory for tpu_custom_call.1']
    #allocation5 [shape = 'u8[32768]{0}', space=vmem, size = 0x8000, scoped, tag = 'input window, operand 1, single buffered']
    #allocation6 [shape = 's32[1]{0}', space=sflag, size = 0x4, scoped, tag = 'scoped memory for tpu_custom_call.1']
    #allocation7 [shape = 'u8[1024]{0}', space=vmem, size = 0x400, scoped, tag = 'output window, operand 1, single buffered']
    %9 = vsyncpa [#allocation3], 0
    %10 = vsyncpa [#allocation6], 0
    %11 = vsyncpa [#allocation4], 0
    // Predicated region
    $region2: #{tpu_custom_call.1} parent=1 // pred_check
      _
    $region3: #{tpu_custom_call.1} parent=1 // pred_check_branch
      %13 = sbr.rel (0) target = $region5
    $region4: #{tpu_custom_call.1} parent=1 // pred_region
      %s15 = ssub.s32 4096, 4096
      %16 = vsyncadd [#allocation3], %s15
      %s17 = sshll.u32 [#allocation2], 4
      %s18 = int_to_ptr.vmem [resolvable:$true] %s17
      %23 = dma.hbm_to_vmem [thread:$0]  %s0, 4096, %s18, [#allocation3], 64, 64, 4
    $region5: #{tpu_custom_call.1} parent=1 // pred_fallthru
      _
    // Predicated region
    $region6: #{tpu_custom_call.1} parent=1 // pred_check
      _
    $region7: #{tpu_custom_call.1} parent=1 // pred_check_branch
      %25 = sbr.rel (0) target = $region9
    $region8: #{tpu_custom_call.1} parent=1 // pred_region
      %s27 = ssub.s32 1024, 1024
      %28 = vsyncadd [#allocation6], %s27
      %s29 = sshll.u32 [#allocation5], 4
      %s30 = int_to_ptr.vmem [resolvable:$true] %s29
      %35 = dma.hbm_to_vmem [thread:$0]  %s1, 1024, %s30, [#allocation6], 64, 64, 4
    $region9: #{tpu_custom_call.1} parent=1 // pred_fallthru
      _
    // Predicated region
    $region10: #{tpu_custom_call.1} parent=1 // pred_check
      _
    $region11: #{tpu_custom_call.1} parent=1 // pred_check_branch
      %37 = sbr.rel (0) target = $region13
    $region12: #{tpu_custom_call.1} parent=1 // pred_region
      %38 = dma.done [#allocation3], 4096
    $region13: #{tpu_custom_call.1} parent=1 // pred_fallthru
      _
    // Predicated region
    $region14: #{tpu_custom_call.1} parent=1 // pred_check
      _
    $region15: #{tpu_custom_call.1} parent=1 // pred_check_branch
      %40 = sbr.rel (0) target = $region17
    $region16: #{tpu_custom_call.1} parent=1 // pred_region
      %41 = dma.done [#allocation6], 1024
    $region17: #{tpu_custom_call.1} parent=1 // pred_fallthru
      _
    %v43 = vld [vmem:[#allocation2] sm:$0xf]
    %v44 = vld [vmem:[#allocation2 + $0x4] sm:$0xf]
    %v45 = vld [vmem:[#allocation2 + $0x8] sm:$0xf]
    %v46 = vld [vmem:[#allocation2 + $0xc] sm:$0xf]
    %v47 = vld [vmem:[#allocation2 + $0x10] sm:$0xf]
    %v48 = vld [vmem:[#allocation2 + $0x14] sm:$0xf]
    %v49 = vld [vmem:[#allocation2 + $0x18] sm:$0xf]
    %v50 = vld [vmem:[#allocation2 + $0x1c] sm:$0xf]
    %v51 = vld [vmem:[#allocation2 + $0x20] sm:$0xf]
    %v52 = vld [vmem:[#allocation2 + $0x24] sm:$0xf]
    %v53 = vld [vmem:[#allocation2 + $0x28] sm:$0xf]
    %v54 = vld [vmem:[#allocation2 + $0x2c] sm:$0xf]
    %v55 = vld [vmem:[#allocation2 + $0x30] sm:$0xf]
    %v56 = vld [vmem:[#allocation2 + $0x34] sm:$0xf]
    %v57 = vld [vmem:[#allocation2 + $0x38] sm:$0xf]
    %v58 = vld [vmem:[#allocation2 + $0x3c] sm:$0xf]
    %v59 = vld [vmem:[#allocation2 + $0x40] sm:$0xf]
    %v60 = vld [vmem:[#allocation2 + $0x44] sm:$0xf]
    %v61 = vld [vmem:[#allocation2 + $0x48] sm:$0xf]
    %v62 = vld [vmem:[#allocation2 + $0x4c] sm:$0xf]
    %v63 = vld [vmem:[#allocation2 + $0x50] sm:$0xf]
    %v64 = vld [vmem:[#allocation2 + $0x54] sm:$0xf]
    %v65 = vld [vmem:[#allocation2 + $0x58] sm:$0xf]
    %v66 = vld [vmem:[#allocation2 + $0x5c] sm:$0xf]
    %v67 = vld [vmem:[#allocation2 + $0x60] sm:$0xf]
    %v68 = vld [vmem:[#allocation2 + $0x64] sm:$0xf]
    %v69 = vld [vmem:[#allocation2 + $0x68] sm:$0xf]
    %v70 = vld [vmem:[#allocation2 + $0x6c] sm:$0xf]
    %v71 = vld [vmem:[#allocation2 + $0x70] sm:$0xf]
    %v72 = vld [vmem:[#allocation2 + $0x74] sm:$0xf]
    %v73 = vld [vmem:[#allocation2 + $0x78] sm:$0xf]
    %v74 = vld [vmem:[#allocation2 + $0x7c] sm:$0xf]
    %v75 = vld [vmem:[#allocation2 + $0x80] sm:$0xf]
    %v76 = vld [vmem:[#allocation2 + $0x84] sm:$0xf]
    %v77 = vld [vmem:[#allocation2 + $0x88] sm:$0xf]
    %v78 = vld [vmem:[#allocation2 + $0x8c] sm:$0xf]
    %v79 = vld [vmem:[#allocation2 + $0x90] sm:$0xf]
    %v80 = vld [vmem:[#allocation2 + $0x94] sm:$0xf]
    %v81 = vld [vmem:[#allocation2 + $0x98] sm:$0xf]
    %v82 = vld [vmem:[#allocation2 + $0x9c] sm:$0xf]
    %v83 = vld [vmem:[#allocation2 + $0xa0] sm:$0xf]
    %v84 = vld [vmem:[#allocation2 + $0xa4] sm:$0xf]
    %v85 = vld [vmem:[#allocation2 + $0xa8] sm:$0xf]
    %v86 = vld [vmem:[#allocation2 + $0xac] sm:$0xf]
    %v87 = vld [vmem:[#allocation2 + $0xb0] sm:$0xf]
    %v88 = vld [vmem:[#allocation2 + $0xb4] sm:$0xf]
    %v89 = vld [vmem:[#allocation2 + $0xb8] sm:$0xf]
    %v90 = vld [vmem:[#allocation2 + $0xbc] sm:$0xf]
    %v91 = vld [vmem:[#allocation2 + $0xc0] sm:$0xf]
    %v92 = vld [vmem:[#allocation2 + $0xc4] sm:$0xf]
    %v93 = vld [vmem:[#allocation2 + $0xc8] sm:$0xf]
    %v94 = vld [vmem:[#allocation2 + $0xcc] sm:$0xf]
    %v95 = vld [vmem:[#allocation2 + $0xd0] sm:$0xf]
    %v96 = vld [vmem:[#allocation2 + $0xd4] sm:$0xf]
    %v97 = vld [vmem:[#allocation2 + $0xd8] sm:$0xf]
    %v98 = vld [vmem:[#allocation2 + $0xdc] sm:$0xf]
    %v99 = vld [vmem:[#allocation2 + $0xe0] sm:$0xf]
    %v100 = vld [vmem:[#allocation2 + $0xe4] sm:$0xf]
    %v101 = vld [vmem:[#allocation2 + $0xe8] sm:$0xf]
    %v102 = vld [vmem:[#allocation2 + $0xec] sm:$0xf]
    %v103 = vld [vmem:[#allocation2 + $0xf0] sm:$0xf]
    %v104 = vld [vmem:[#allocation2 + $0xf4] sm:$0xf]
    %v105 = vld [vmem:[#allocation2 + $0xf8] sm:$0xf]
    %v106 = vld [vmem:[#allocation2 + $0xfc] sm:$0xf]
    %v107 = vld [vmem:[#allocation5] sm:$0xf]
    %v108 = vld [vmem:[#allocation5 + $0x4] sm:$0xf]
    %v109 = vld [vmem:[#allocation5 + $0x8] sm:$0xf]
    %v110 = vld [vmem:[#allocation5 + $0xc] sm:$0xf]
    %v111 = vld [vmem:[#allocation5 + $0x10] sm:$0xf]
    %v112 = vld [vmem:[#allocation5 + $0x14] sm:$0xf]
    %v113 = vld [vmem:[#allocation5 + $0x18] sm:$0xf]
    %v114 = vld [vmem:[#allocation5 + $0x1c] sm:$0xf]
    %v115 = vld [vmem:[#allocation5 + $0x20] sm:$0xf]
    %v116 = vld [vmem:[#allocation5 + $0x24] sm:$0xf]
    %v117 = vld [vmem:[#allocation5 + $0x28] sm:$0xf]
    %v118 = vld [vmem:[#allocation5 + $0x2c] sm:$0xf]
    %v119 = vld [vmem:[#allocation5 + $0x30] sm:$0xf]
    %v120 = vld [vmem:[#allocation5 + $0x34] sm:$0xf]
    %v121 = vld [vmem:[#allocation5 + $0x38] sm:$0xf]
    %v122 = vld [vmem:[#allocation5 + $0x3c] sm:$0xf]
    %v187 = vunpack.c.l.b16 %v43
    %v188 = vunpack.c.l.b16 %v44
    %v189 = vunpack.c.l.b16 %v45
    %v190 = vunpack.c.l.b16 %v46
    %v191 = vunpack.c.l.b16 %v47
    %v192 = vunpack.c.l.b16 %v48
    %v193 = vunpack.c.l.b16 %v49
    %v194 = vunpack.c.l.b16 %v50
    %v195 = vunpack.c.l.b16 %v51
    %v196 = vunpack.c.l.b16 %v52
    %v197 = vunpack.c.l.b16 %v53
    %v198 = vunpack.c.l.b16 %v54
    %v199 = vunpack.c.l.b16 %v55
    %v200 = vunpack.c.l.b16 %v56
    %v201 = vunpack.c.l.b16 %v57
    %v202 = vunpack.c.l.b16 %v58
    %v203 = vunpack.c.l.b16 %v59
    %v204 = vunpack.c.l.b16 %v60
    %v205 = vunpack.c.l.b16 %v61
    %v206 = vunpack.c.l.b16 %v62
    %v207 = vunpack.c.l.b16 %v63
    %v208 = vunpack.c.l.b16 %v64
    %v209 = vunpack.c.l.b16 %v65
    %v210 = vunpack.c.l.b16 %v66
    %v211 = vunpack.c.l.b16 %v67
    %v212 = vunpack.c.l.b16 %v68
    %v213 = vunpack.c.l.b16 %v69
    %v214 = vunpack.c.l.b16 %v70
    %v215 = vunpack.c.l.b16 %v71
    %v216 = vunpack.c.l.b16 %v72
    %v217 = vunpack.c.l.b16 %v73
    %v218 = vunpack.c.l.b16 %v74
    %v219 = vunpack.c.l.b16 %v75
    %v220 = vunpack.c.l.b16 %v76
    %v221 = vunpack.c.l.b16 %v77
    %v222 = vunpack.c.l.b16 %v78
    %v223 = vunpack.c.l.b16 %v79
    %v224 = vunpack.c.l.b16 %v80
    %v225 = vunpack.c.l.b16 %v81
    %v226 = vunpack.c.l.b16 %v82
    %v227 = vunpack.c.l.b16 %v83
    %v228 = vunpack.c.l.b16 %v84
    %v229 = vunpack.c.l.b16 %v85
    %v230 = vunpack.c.l.b16 %v86
    %v231 = vunpack.c.l.b16 %v87
    %v232 = vunpack.c.l.b16 %v88
    %v233 = vunpack.c.l.b16 %v89
    %v234 = vunpack.c.l.b16 %v90
    %v235 = vunpack.c.l.b16 %v91
    %v236 = vunpack.c.l.b16 %v92
    %v237 = vunpack.c.l.b16 %v93
    %v238 = vunpack.c.l.b16 %v94
    %v239 = vunpack.c.l.b16 %v95
    %v240 = vunpack.c.l.b16 %v96
    %v241 = vunpack.c.l.b16 %v97
    %v242 = vunpack.c.l.b16 %v98
    %v243 = vunpack.c.l.b16 %v99
    %v244 = vunpack.c.l.b16 %v100
    %v245 = vunpack.c.l.b16 %v101
    %v246 = vunpack.c.l.b16 %v102
    %v247 = vunpack.c.l.b16 %v103
    %v248 = vunpack.c.l.b16 %v104
    %v249 = vunpack.c.l.b16 %v105
    %v250 = vunpack.c.l.b16 %v106
    %v251 = vpack.c.b16 %v188, %v187
    %v252 = vpack.c.b16 %v190, %v189
    %v253 = vpack.c.b16 %v192, %v191
    %v254 = vpack.c.b16 %v194, %v193
    %v255 = vpack.c.b16 %v196, %v195
    %v256 = vpack.c.b16 %v198, %v197
    %v257 = vpack.c.b16 %v200, %v199
    %v258 = vpack.c.b16 %v202, %v201
    %v259 = vpack.c.b16 %v204, %v203
    %v260 = vpack.c.b16 %v206, %v205
    %v261 = vpack.c.b16 %v208, %v207
    %v262 = vpack.c.b16 %v210, %v209
    %v263 = vpack.c.b16 %v212, %v211
    %v264 = vpack.c.b16 %v214, %v213
    %v265 = vpack.c.b16 %v216, %v215
    %v266 = vpack.c.b16 %v218, %v217
    %v267 = vpack.c.b16 %v220, %v219
    %v268 = vpack.c.b16 %v222, %v221
    %v269 = vpack.c.b16 %v224, %v223
    %v270 = vpack.c.b16 %v226, %v225
    %v271 = vpack.c.b16 %v228, %v227
    %v272 = vpack.c.b16 %v230, %v229
    %v273 = vpack.c.b16 %v232, %v231
    %v274 = vpack.c.b16 %v234, %v233
    %v275 = vpack.c.b16 %v236, %v235
    %v276 = vpack.c.b16 %v238, %v237
    %v277 = vpack.c.b16 %v240, %v239
    %v278 = vpack.c.b16 %v242, %v241
    %v279 = vpack.c.b16 %v244, %v243
    %v280 = vpack.c.b16 %v246, %v245
    %v281 = vpack.c.b16 %v248, %v247
    %v282 = vpack.c.b16 %v250, %v249
    %v331 = vunpack.c.l.b16 %v107
    %v332 = vunpack.c.l.b16 %v108
    %v333 = vunpack.c.l.b16 %v109
    %v334 = vunpack.c.l.b16 %v110
    %v335 = vunpack.c.l.b16 %v111
    %v336 = vunpack.c.l.b16 %v112
    %v337 = vunpack.c.l.b16 %v113
    %v338 = vunpack.c.l.b16 %v114
    %v339 = vunpack.c.l.b16 %v115
    %v340 = vunpack.c.l.b16 %v116
    %v341 = vunpack.c.l.b16 %v117
    %v342 = vunpack.c.l.b16 %v118
    %v343 = vunpack.c.l.b16 %v119
    %v344 = vunpack.c.l.b16 %v120
    %v345 = vunpack.c.l.b16 %v121
    %v346 = vunpack.c.l.b16 %v122
    %v347 = vpack.c.b16 %v332, %v331
    %v348 = vpack.c.b16 %v334, %v333
    %v349 = vpack.c.b16 %v336, %v335
    %v350 = vpack.c.b16 %v338, %v337
    %v351 = vpack.c.b16 %v340, %v339
    %v352 = vpack.c.b16 %v342, %v341
    %v353 = vpack.c.b16 %v344, %v343
    %v354 = vpack.c.b16 %v346, %v345
    %363 = vmatprep.subr.bf16.mxu0 0
    %364 = vmatpush1.bf16.msra.mxu0 %v347
    %365 = vmatprep.subr.bf16.mxu0 0
    %366 = vmatpush1.bf16.msra.mxu0 %v348
    %367 = vmatprep.subr.bf16.mxu0 0
    %368 = vmatpush1.bf16.msra.mxu0 %v349
    %369 = vmatprep.subr.bf16.mxu0 0
    %370 = vmatpush1.bf16.msra.mxu0 %v350
    %371 = vmatprep.subr.bf16.mxu0 0
    %372 = vmatpush1.bf16.msra.mxu0 %v351
    %373 = vmatprep.subr.bf16.mxu0 0
    %374 = vmatpush1.bf16.msra.mxu0 %v352
    %375 = vmatprep.subr.bf16.mxu0 0
    %376 = vmatpush1.bf16.msra.mxu0 %v353
    %377 = vmatprep.subr.bf16.mxu0 0
    %378 = vmatpush1.bf16.msra.mxu0 %v354
    %379 = vmatprep.subr.bf16.mxu0 0
    %380 = vmatpush1.bf16.msra.mxu0 0
    %381 = vmatprep.subr.bf16.mxu0 0
    %382 = vmatpush1.bf16.msra.mxu0 0
    %383 = vmatprep.subr.bf16.mxu0 0
    %384 = vmatpush1.bf16.msra.mxu0 0
    %385 = vmatprep.subr.bf16.mxu0 0
    %386 = vmatpush1.bf16.msra.mxu0 0
    %387 = vmatprep.subr.bf16.mxu0 0
    %388 = vmatpush1.bf16.msra.mxu0 0
    %389 = vmatprep.subr.bf16.mxu0 0
    %390 = vmatpush1.bf16.msra.mxu0 0
    %391 = vmatprep.subr.bf16.mxu0 0
    %392 = vmatpush1.bf16.msra.mxu0 0
    %393 = vmatprep.subr.bf16.mxu0 0
    %394 = vmatpush1.bf16.msra.mxu0 0
    %395 = vmatprep.mubr.bf16.mxu0 0
    %396 = vmatmul.mubr.bf16.gmra.mrb[0].mxu0 %v251
    %v397 = vpop.f32.mrb[0].mxu0
    %v398 = vadd.f32 0.0, %v397
    %v399 = vpop.f32.mrb[0].mxu0
    %v400 = vpop.f32.mrb[0].mxu0
    %v401 = vadd.f32 0.0, %v400
    %v402 = vpop.f32.mrb[0].mxu0
    %403 = vmatprep.mubr.bf16.mxu0 0
    %404 = vmatmul.mubr.bf16.gmra.mrb[0].mxu0 %v252
    %v405 = vpop.f32.mrb[0].mxu0
    %v406 = vadd.f32 0.0, %v405
    %v407 = vpop.f32.mrb[0].mxu0
    %v408 = vpop.f32.mrb[0].mxu0
    %v409 = vadd.f32 0.0, %v408
    %v410 = vpop.f32.mrb[0].mxu0
    %411 = vmatprep.mubr.bf16.mxu0 0
    %412 = vmatmul.mubr.bf16.gmra.mrb[0].mxu0 %v253
    %v413 = vpop.f32.mrb[0].mxu0
    %v414 = vadd.f32 0.0, %v413
    %v415 = vpop.f32.mrb[0].mxu0
    %v416 = vpop.f32.mrb[0].mxu0
    %v417 = vadd.f32 0.0, %v416
    %v418 = vpop.f32.mrb[0].mxu0
    %419 = vmatprep.mubr.bf16.mxu0 0
    %420 = vmatmul.mubr.bf16.gmra.mrb[0].mxu0 %v254
    %v421 = vpop.f32.mrb[0].mxu0
    %v422 = vadd.f32 0.0, %v421
    %v423 = vpop.f32.mrb[0].mxu0
    %v424 = vpop.f32.mrb[0].mxu0
    %v425 = vadd.f32 0.0, %v424
    %v426 = vpop.f32.mrb[0].mxu0
    %427 = vmatprep.mubr.bf16.mxu0 0
    %428 = vmatmul.mubr.bf16.gmra.mrb[0].mxu0 %v255
    %v429 = vpop.f32.mrb[0].mxu0
    %v430 = vadd.f32 0.0, %v429
    %v431 = vpop.f32.mrb[0].mxu0
    %v432 = vpop.f32.mrb[0].mxu0
    %v433 = vadd.f32 0.0, %v432
    %v434 = vpop.f32.mrb[0].mxu0
    %435 = vmatprep.mubr.bf16.mxu0 0
    %436 = vmatmul.mubr.bf16.gmra.mrb[0].mxu0 %v256
    %v437 = vpop.f32.mrb[0].mxu0
    %v438 = vadd.f32 0.0, %v437
    %v439 = vpop.f32.mrb[0].mxu0
    %v440 = vpop.f32.mrb[0].mxu0
    %v441 = vadd.f32 0.0, %v440
    %v442 = vpop.f32.mrb[0].mxu0
    %443 = vmatprep.mubr.bf16.mxu0 0
    %444 = vmatmul.mubr.bf16.gmra.mrb[0].mxu0 %v257
    %v445 = vpop.f32.mrb[0].mxu0
    %v446 = vadd.f32 0.0, %v445
    %v447 = vpop.f32.mrb[0].mxu0
    %v448 = vpop.f32.mrb[0].mxu0
    %v449 = vadd.f32 0.0, %v448
    %v450 = vpop.f32.mrb[0].mxu0
    %451 = vmatprep.mubr.bf16.mxu0 0
    %452 = vmatmul.mubr.bf16.gmra.mrb[0].mxu0 %v258
    %v453 = vpop.f32.mrb[0].mxu0
    %v454 = vadd.f32 0.0, %v453
    %v455 = vpop.f32.mrb[0].mxu0
    %v456 = vpop.f32.mrb[0].mxu0
    %v457 = vadd.f32 0.0, %v456
    %v458 = vpop.f32.mrb[0].mxu0
    %459 = vmatprep.mubr.bf16.mxu0 0
    %460 = vmatmul.mubr.bf16.gmra.mrb[0].mxu0 %v259
    %v461 = vpop.f32.mrb[0].mxu0
    %v462 = vadd.f32 0.0, %v461
    %v463 = vpop.f32.mrb[0].mxu0
    %v464 = vpop.f32.mrb[0].mxu0
    %v465 = vadd.f32 0.0, %v464
    %v466 = vpop.f32.mrb[0].mxu0
    %467 = vmatprep.mubr.bf16.mxu0 0
    %468 = vmatmul.mubr.bf16.gmra.mrb[0].mxu0 %v260
    %v469 = vpop.f32.mrb[0].mxu0
    %v470 = vadd.f32 0.0, %v469
    %v471 = vpop.f32.mrb[0].mxu0
    %v472 = vpop.f32.mrb[0].mxu0
    %v473 = vadd.f32 0.0, %v472
    %v474 = vpop.f32.mrb[0].mxu0
    %475 = vmatprep.mubr.bf16.mxu0 0
    %476 = vmatmul.mubr.bf16.gmra.mrb[0].mxu0 %v261
    %v477 = vpop.f32.mrb[0].mxu0
    %v478 = vadd.f32 0.0, %v477
    %v479 = vpop.f32.mrb[0].mxu0
    %v480 = vpop.f32.mrb[0].mxu0
    %v481 = vadd.f32 0.0, %v480
    %v482 = vpop.f32.mrb[0].mxu0
    %483 = vmatprep.mubr.bf16.mxu0 0
    %484 = vmatmul.mubr.bf16.gmra.mrb[0].mxu0 %v262
    %v485 = vpop.f32.mrb[0].mxu0
    %v486 = vadd.f32 0.0, %v485
    %v487 = vpop.f32.mrb[0].mxu0
    %v488 = vpop.f32.mrb[0].mxu0
    %v489 = vadd.f32 0.0, %v488
    %v490 = vpop.f32.mrb[0].mxu0
    %491 = vmatprep.mubr.bf16.mxu0 0
    %492 = vmatmul.mubr.bf16.gmra.mrb[0].mxu0 %v263
    %v493 = vpop.f32.mrb[0].mxu0
    %v494 = vadd.f32 0.0, %v493
    %v495 = vpop.f32.mrb[0].mxu0
    %v496 = vpop.f32.mrb[0].mxu0
    %v497 = vadd.f32 0.0, %v496
    %v498 = vpop.f32.mrb[0].mxu0
    %499 = vmatprep.mubr.bf16.mxu0 0
    %500 = vmatmul.mubr.bf16.gmra.mrb[0].mxu0 %v264
    %v501 = vpop.f32.mrb[0].mxu0
    %v502 = vadd.f32 0.0, %v501
    %v503 = vpop.f32.mrb[0].mxu0
    %v504 = vpop.f32.mrb[0].mxu0
    %v505 = vadd.f32 0.0, %v504
    %v506 = vpop.f32.mrb[0].mxu0
    %507 = vmatprep.mubr.bf16.mxu0 0
    %508 = vmatmul.mubr.bf16.gmra.mrb[0].mxu0 %v265
    %v509 = vpop.f32.mrb[0].mxu0
    %v510 = vadd.f32 0.0, %v509
    %v511 = vpop.f32.mrb[0].mxu0
    %v512 = vpop.f32.mrb[0].mxu0
    %v513 = vadd.f32 0.0, %v512
    %v514 = vpop.f32.mrb[0].mxu0
    %515 = vmatprep.mubr.bf16.mxu0 0
    %516 = vmatmul.mubr.bf16.gmra.mrb[0].mxu0 %v266
    %v517 = vpop.f32.mrb[0].mxu0
    %v518 = vadd.f32 0.0, %v517
    %v519 = vpop.f32.mrb[0].mxu0
    %v520 = vpop.f32.mrb[0].mxu0
    %v521 = vadd.f32 0.0, %v520
    %v522 = vpop.f32.mrb[0].mxu0
    %523 = vmatprep.mubr.bf16.mxu0 0
    %524 = vmatmul.mubr.bf16.gmra.mrb[0].mxu0 %v267
    %v525 = vpop.f32.mrb[0].mxu0
    %v526 = vadd.f32 0.0, %v525
    %v527 = vpop.f32.mrb[0].mxu0
    %v528 = vpop.f32.mrb[0].mxu0
    %v529 = vadd.f32 0.0, %v528
    %v530 = vpop.f32.mrb[0].mxu0
    %531 = vmatprep.mubr.bf16.mxu0 0
    %532 = vmatmul.mubr.bf16.gmra.mrb[0].mxu0 %v268
    %v533 = vpop.f32.mrb[0].mxu0
    %v534 = vadd.f32 0.0, %v533
    %v535 = vpop.f32.mrb[0].mxu0
    %v536 = vpop.f32.mrb[0].mxu0
    %v537 = vadd.f32 0.0, %v536
    %v538 = vpop.f32.mrb[0].mxu0
    %539 = vmatprep.mubr.bf16.mxu0 0
    %540 = vmatmul.mubr.bf16.gmra.mrb[0].mxu0 %v269
    %v541 = vpop.f32.mrb[0].mxu0
    %v542 = vadd.f32 0.0, %v541
    %v543 = vpop.f32.mrb[0].mxu0
    %v544 = vpop.f32.mrb[0].mxu0
    %v545 = vadd.f32 0.0, %v544
    %v546 = vpop.f32.mrb[0].mxu0
    %547 = vmatprep.mubr.bf16.mxu0 0
    %548 = vmatmul.mubr.bf16.gmra.mrb[0].mxu0 %v270
    %v549 = vpop.f32.mrb[0].mxu0
    %v550 = vadd.f32 0.0, %v549
    %v551 = vpop.f32.mrb[0].mxu0
    %v552 = vpop.f32.mrb[0].mxu0
    %v553 = vadd.f32 0.0, %v552
    %v554 = vpop.f32.mrb[0].mxu0
    %555 = vmatprep.mubr.bf16.mxu0 0
    %556 = vmatmul.mubr.bf16.gmra.mrb[0].mxu0 %v271
    %v557 = vpop.f32.mrb[0].mxu0
    %v558 = vadd.f32 0.0, %v557
    %v559 = vpop.f32.mrb[0].mxu0
    %v560 = vpop.f32.mrb[0].mxu0
    %v561 = vadd.f32 0.0, %v560
    %v562 = vpop.f32.mrb[0].mxu0
    %563 = vmatprep.mubr.bf16.mxu0 0
    %564 = vmatmul.mubr.bf16.gmra.mrb[0].mxu0 %v272
    %v565 = vpop.f32.mrb[0].mxu0
    %v566 = vadd.f32 0.0, %v565
    %v567 = vpop.f32.mrb[0].mxu0
    %v568 = vpop.f32.mrb[0].mxu0
    %v569 = vadd.f32 0.0, %v568
    %v570 = vpop.f32.mrb[0].mxu0
    %571 = vmatprep.mubr.bf16.mxu0 0
    %572 = vmatmul.mubr.bf16.gmra.mrb[0].mxu0 %v273
    %v573 = vpop.f32.mrb[0].mxu0
    %v574 = vadd.f32 0.0, %v573
    %v575 = vpop.f32.mrb[0].mxu0
    %v576 = vpop.f32.mrb[0].mxu0
    %v577 = vadd.f32 0.0, %v576
    %v578 = vpop.f32.mrb[0].mxu0
    %579 = vmatprep.mubr.bf16.mxu0 0
    %580 = vmatmul.mubr.bf16.gmra.mrb[0].mxu0 %v274
    %v581 = vpop.f32.mrb[0].mxu0
    %v582 = vadd.f32 0.0, %v581
    %v583 = vpop.f32.mrb[0].mxu0
    %v584 = vpop.f32.mrb[0].mxu0
    %v585 = vadd.f32 0.0, %v584
    %v586 = vpop.f32.mrb[0].mxu0
    %587 = vmatprep.mubr.bf16.mxu0 0
    %588 = vmatmul.mubr.bf16.gmra.mrb[0].mxu0 %v275
    %v589 = vpop.f32.mrb[0].mxu0
    %v590 = vadd.f32 0.0, %v589
    %v591 = vpop.f32.mrb[0].mxu0
    %v592 = vpop.f32.mrb[0].mxu0
    %v593 = vadd.f32 0.0, %v592
    %v594 = vpop.f32.mrb[0].mxu0
    %595 = vmatprep.mubr.bf16.mxu0 0
    %596 = vmatmul.mubr.bf16.gmra.mrb[0].mxu0 %v276
    %v597 = vpop.f32.mrb[0].mxu0
    %v598 = vadd.f32 0.0, %v597
    %v599 = vpop.f32.mrb[0].mxu0
    %v600 = vpop.f32.mrb[0].mxu0
    %v601 = vadd.f32 0.0, %v600
    %v602 = vpop.f32.mrb[0].mxu0
    %603 = vmatprep.mubr.bf16.mxu0 0
    %604 = vmatmul.mubr.bf16.gmra.mrb[0].mxu0 %v277
    %v605 = vpop.f32.mrb[0].mxu0
    %v606 = vadd.f32 0.0, %v605
    %v607 = vpop.f32.mrb[0].mxu0
    %v608 = vpop.f32.mrb[0].mxu0
    %v609 = vadd.f32 0.0, %v608
    %v610 = vpop.f32.mrb[0].mxu0
    %611 = vmatprep.mubr.bf16.mxu0 0
    %612 = vmatmul.mubr.bf16.gmra.mrb[0].mxu0 %v278
    %v613 = vpop.f32.mrb[0].mxu0
    %v614 = vadd.f32 0.0, %v613
    %v615 = vpop.f32.mrb[0].mxu0
    %v616 = vpop.f32.mrb[0].mxu0
    %v617 = vadd.f32 0.0, %v616
    %v618 = vpop.f32.mrb[0].mxu0
    %619 = vmatprep.mubr.bf16.mxu0 0
    %620 = vmatmul.mubr.bf16.gmra.mrb[0].mxu0 %v279
    %v621 = vpop.f32.mrb[0].mxu0
    %v622 = vadd.f32 0.0, %v621
    %v623 = vpop.f32.mrb[0].mxu0
    %v624 = vpop.f32.mrb[0].mxu0
    %v625 = vadd.f32 0.0, %v624
    %v626 = vpop.f32.mrb[0].mxu0
    %627 = vmatprep.mubr.bf16.mxu0 0
    %628 = vmatmul.mubr.bf16.gmra.mrb[0].mxu0 %v280
    %v629 = vpop.f32.mrb[0].mxu0
    %v630 = vadd.f32 0.0, %v629
    %v631 = vpop.f32.mrb[0].mxu0
    %v632 = vpop.f32.mrb[0].mxu0
    %v633 = vadd.f32 0.0, %v632
    %v634 = vpop.f32.mrb[0].mxu0
    %635 = vmatprep.mubr.bf16.mxu0 0
    %636 = vmatmul.mubr.bf16.gmra.mrb[0].mxu0 %v281
    %v637 = vpop.f32.mrb[0].mxu0
    %v638 = vadd.f32 0.0, %v637
    %v639 = vpop.f32.mrb[0].mxu0
    %v640 = vpop.f32.mrb[0].mxu0
    %v641 = vadd.f32 0.0, %v640
    %v642 = vpop.f32.mrb[0].mxu0
    %643 = vmatprep.mubr.bf16.mxu0 0
    %644 = vmatmul.mubr.bf16.gmra.mrb[0].mxu0 %v282
    %v645 = vpop.f32.mrb[0].mxu0
    %v646 = vadd.f32 0.0, %v645
    %v647 = vpop.f32.mrb[0].mxu0
    %v648 = vpop.f32.mrb[0].mxu0
    %v649 = vadd.f32 0.0, %v648
    %v650 = vpop.f32.mrb[0].mxu0
    %651 = vdwg.mxu0
    %v652 = vpack.c.bf16 %v401, %v398
    %v653 = vpack.c.bf16 %v409, %v406
    %v654 = vpack.c.bf16 %v417, %v414
    %v655 = vpack.c.bf16 %v425, %v422
    %v656 = vpack.c.bf16 %v433, %v430
    %v657 = vpack.c.bf16 %v441, %v438
    %v658 = vpack.c.bf16 %v449, %v446
    %v659 = vpack.c.bf16 %v457, %v454
    %v660 = vpack.c.bf16 %v465, %v462
    %v661 = vpack.c.bf16 %v473, %v470
    %v662 = vpack.c.bf16 %v481, %v478
    %v663 = vpack.c.bf16 %v489, %v486
    %v664 = vpack.c.bf16 %v497, %v494
    %v665 = vpack.c.bf16 %v505, %v502
    %v666 = vpack.c.bf16 %v513, %v510
    %v667 = vpack.c.bf16 %v521, %v518
    %v668 = vpack.c.bf16 %v529, %v526
    %v669 = vpack.c.bf16 %v537, %v534
    %v670 = vpack.c.bf16 %v545, %v542
    %v671 = vpack.c.bf16 %v553, %v550
    %v672 = vpack.c.bf16 %v561, %v558
    %v673 = vpack.c.bf16 %v569, %v566
    %v674 = vpack.c.bf16 %v577, %v574
    %v675 = vpack.c.bf16 %v585, %v582
    %v676 = vpack.c.bf16 %v593, %v590
    %v677 = vpack.c.bf16 %v601, %v598
    %v678 = vpack.c.bf16 %v609, %v606
    %v679 = vpack.c.bf16 %v617, %v614
    %v680 = vpack.c.bf16 %v625, %v622
    %v681 = vpack.c.bf16 %v633, %v630
    %v682 = vpack.c.bf16 %v641, %v638
    %v683 = vpack.c.bf16 %v649, %v646
    %v716 = vunpack.c.l.b16 %v652
    %v717 = vunpack.c.h.b16 %v652
    %v718 = vunpack.c.l.b16 %v653
    %v719 = vunpack.c.h.b16 %v653
    %v720 = vunpack.c.l.b16 %v654
    %v721 = vunpack.c.h.b16 %v654
    %v722 = vunpack.c.l.b16 %v655
    %v723 = vunpack.c.h.b16 %v655
    %v724 = vunpack.c.l.b16 %v656
    %v725 = vunpack.c.h.b16 %v656
    %v726 = vunpack.c.l.b16 %v657
    %v727 = vunpack.c.h.b16 %v657
    %v728 = vunpack.c.l.b16 %v658
    %v729 = vunpack.c.h.b16 %v658
    %v730 = vunpack.c.l.b16 %v659
    %v731 = vunpack.c.h.b16 %v659
    %v732 = vunpack.c.l.b16 %v660
    %v733 = vunpack.c.h.b16 %v660
    %v734 = vunpack.c.l.b16 %v661
    %v735 = vunpack.c.h.b16 %v661
    %v736 = vunpack.c.l.b16 %v662
    %v737 = vunpack.c.h.b16 %v662
    %v738 = vunpack.c.l.b16 %v663
    %v739 = vunpack.c.h.b16 %v663
    %v740 = vunpack.c.l.b16 %v664
    %v741 = vunpack.c.h.b16 %v664
    %v742 = vunpack.c.l.b16 %v665
    %v743 = vunpack.c.h.b16 %v665
    %v744 = vunpack.c.l.b16 %v666
    %v745 = vunpack.c.h.b16 %v666
    %v746 = vunpack.c.l.b16 %v667
    %v747 = vunpack.c.h.b16 %v667
    %v748 = vunpack.c.l.b16 %v668
    %v749 = vunpack.c.h.b16 %v668
    %v750 = vunpack.c.l.b16 %v669
    %v751 = vunpack.c.h.b16 %v669
    %v752 = vunpack.c.l.b16 %v670
    %v753 = vunpack.c.h.b16 %v670
    %v754 = vunpack.c.l.b16 %v671
    %v755 = vunpack.c.h.b16 %v671
    %v756 = vunpack.c.l.b16 %v672
    %v757 = vunpack.c.h.b16 %v672
    %v758 = vunpack.c.l.b16 %v673
    %v759 = vunpack.c.h.b16 %v673
    %v760 = vunpack.c.l.b16 %v674
    %v761 = vunpack.c.h.b16 %v674
    %v762 = vunpack.c.l.b16 %v675
    %v763 = vunpack.c.h.b16 %v675
    %v764 = vunpack.c.l.b16 %v676
    %v765 = vunpack.c.h.b16 %v676
    %v766 = vunpack.c.l.b16 %v677
    %v767 = vunpack.c.h.b16 %v677
    %v768 = vunpack.c.l.b16 %v678
    %v769 = vunpack.c.h.b16 %v678
    %v770 = vunpack.c.l.b16 %v679
    %v771 = vunpack.c.h.b16 %v679
    %v772 = vunpack.c.l.b16 %v680
    %v773 = vunpack.c.h.b16 %v680
    %v774 = vunpack.c.l.b16 %v681
    %v775 = vunpack.c.h.b16 %v681
    %v776 = vunpack.c.l.b16 %v682
    %v777 = vunpack.c.h.b16 %v682
    %v778 = vunpack.c.l.b16 %v683
    %v779 = vunpack.c.h.b16 %v683
    %v780 = vpack.c.b16 %v716, %v716
    %v781 = vpack.c.b16 %v717, %v717
    %v782 = vpack.c.b16 %v718, %v718
    %v783 = vpack.c.b16 %v719, %v719
    %v784 = vpack.c.b16 %v720, %v720
    %v785 = vpack.c.b16 %v721, %v721
    %v786 = vpack.c.b16 %v722, %v722
    %v787 = vpack.c.b16 %v723, %v723
    %v788 = vpack.c.b16 %v724, %v724
    %v789 = vpack.c.b16 %v725, %v725
    %v790 = vpack.c.b16 %v726, %v726
    %v791 = vpack.c.b16 %v727, %v727
    %v792 = vpack.c.b16 %v728, %v728
    %v793 = vpack.c.b16 %v729, %v729
    %v794 = vpack.c.b16 %v730, %v730
    %v795 = vpack.c.b16 %v731, %v731
    %v796 = vpack.c.b16 %v732, %v732
    %v797 = vpack.c.b16 %v733, %v733
    %v798 = vpack.c.b16 %v734, %v734
    %v799 = vpack.c.b16 %v735, %v735
    %v800 = vpack.c.b16 %v736, %v736
    %v801 = vpack.c.b16 %v737, %v737
    %v802 = vpack.c.b16 %v738, %v738
    %v803 = vpack.c.b16 %v739, %v739
    %v804 = vpack.c.b16 %v740, %v740
    %v805 = vpack.c.b16 %v741, %v741
    %v806 = vpack.c.b16 %v742, %v742
    %v807 = vpack.c.b16 %v743, %v743
    %v808 = vpack.c.b16 %v744, %v744
    %v809 = vpack.c.b16 %v745, %v745
    %v810 = vpack.c.b16 %v746, %v746
    %v811 = vpack.c.b16 %v747, %v747
    %v812 = vpack.c.b16 %v748, %v748
    %v813 = vpack.c.b16 %v749, %v749
    %v814 = vpack.c.b16 %v750, %v750
    %v815 = vpack.c.b16 %v751, %v751
    %v816 = vpack.c.b16 %v752, %v752
    %v817 = vpack.c.b16 %v753, %v753
    %v818 = vpack.c.b16 %v754, %v754
    %v819 = vpack.c.b16 %v755, %v755
    %v820 = vpack.c.b16 %v756, %v756
    %v821 = vpack.c.b16 %v757, %v757
    %v822 = vpack.c.b16 %v758, %v758
    %v823 = vpack.c.b16 %v759, %v759
    %v824 = vpack.c.b16 %v760, %v760
    %v825 = vpack.c.b16 %v761, %v761
    %v826 = vpack.c.b16 %v762, %v762
    %v827 = vpack.c.b16 %v763, %v763
    %v828 = vpack.c.b16 %v764, %v764
    %v829 = vpack.c.b16 %v765, %v765
    %v830 = vpack.c.b16 %v766, %v766
    %v831 = vpack.c.b16 %v767, %v767
    %v832 = vpack.c.b16 %v768, %v768
    %v833 = vpack.c.b16 %v769, %v769
    %v834 = vpack.c.b16 %v770, %v770
    %v835 = vpack.c.b16 %v771, %v771
    %v836 = vpack.c.b16 %v772, %v772
    %v837 = vpack.c.b16 %v773, %v773
    %v838 = vpack.c.b16 %v774, %v774
    %v839 = vpack.c.b16 %v775, %v775
    %v840 = vpack.c.b16 %v776, %v776
    %v841 = vpack.c.b16 %v777, %v777
    %v842 = vpack.c.b16 %v778, %v778
    %v843 = vpack.c.b16 %v779, %v779
    %vm908 = vcmask 60416
    %909 = vst.msk [vmem:[%s2] sm:$0xf] %vm908, %v780
    %910 = vst.msk [vmem:[%s2 + $0x4] sm:$0xf] %vm908, %v781
    %911 = vst.msk [vmem:[%s2 + $0x8] sm:$0xf] %vm908, %v782
    %912 = vst.msk [vmem:[%s2 + $0xc] sm:$0xf] %vm908, %v783
    %913 = vst.msk [vmem:[%s2 + $0x10] sm:$0xf] %vm908, %v784
    %914 = vst.msk [vmem:[%s2 + $0x14] sm:$0xf] %vm908, %v785
    %915 = vst.msk [vmem:[%s2 + $0x18] sm:$0xf] %vm908, %v786
    %916 = vst.msk [vmem:[%s2 + $0x1c] sm:$0xf] %vm908, %v787
    %917 = vst.msk [vmem:[%s2 + $0x20] sm:$0xf] %vm908, %v788
    %918 = vst.msk [vmem:[%s2 + $0x24] sm:$0xf] %vm908, %v789
    %919 = vst.msk [vmem:[%s2 + $0x28] sm:$0xf] %vm908, %v790
    %920 = vst.msk [vmem:[%s2 + $0x2c] sm:$0xf] %vm908, %v791
    %921 = vst.msk [vmem:[%s2 + $0x30] sm:$0xf] %vm908, %v792
    %922 = vst.msk [vmem:[%s2 + $0x34] sm:$0xf] %vm908, %v793
    %923 = vst.msk [vmem:[%s2 + $0x38] sm:$0xf] %vm908, %v794
    %924 = vst.msk [vmem:[%s2 + $0x3c] sm:$0xf] %vm908, %v795
    %925 = vst.msk [vmem:[%s2 + $0x40] sm:$0xf] %vm908, %v796
    %926 = vst.msk [vmem:[%s2 + $0x44] sm:$0xf] %vm908, %v797
    %927 = vst.msk [vmem:[%s2 + $0x48] sm:$0xf] %vm908, %v798
    %928 = vst.msk [vmem:[%s2 + $0x4c] sm:$0xf] %vm908, %v799
    %929 = vst.msk [vmem:[%s2 + $0x50] sm:$0xf] %vm908, %v800
    %930 = vst.msk [vmem:[%s2 + $0x54] sm:$0xf] %vm908, %v801
    %931 = vst.msk [vmem:[%s2 + $0x58] sm:$0xf] %vm908, %v802
    %932 = vst.msk [vmem:[%s2 + $0x5c] sm:$0xf] %vm908, %v803
    %933 = vst.msk [vmem:[%s2 + $0x60] sm:$0xf] %vm908, %v804
    %934 = vst.msk [vmem:[%s2 + $0x64] sm:$0xf] %vm908, %v805
    %935 = vst.msk [vmem:[%s2 + $0x68] sm:$0xf] %vm908, %v806
    %936 = vst.msk [vmem:[%s2 + $0x6c] sm:$0xf] %vm908, %v807
    %937 = vst.msk [vmem:[%s2 + $0x70] sm:$0xf] %vm908, %v808
    %938 = vst.msk [vmem:[%s2 + $0x74] sm:$0xf] %vm908, %v809
    %939 = vst.msk [vmem:[%s2 + $0x78] sm:$0xf] %vm908, %v810
    %940 = vst.msk [vmem:[%s2 + $0x7c] sm:$0xf] %vm908, %v811
    %941 = vst.msk [vmem:[%s2 + $0x80] sm:$0xf] %vm908, %v812
    %942 = vst.msk [vmem:[%s2 + $0x84] sm:$0xf] %vm908, %v813
    %943 = vst.msk [vmem:[%s2 + $0x88] sm:$0xf] %vm908, %v814
    %944 = vst.msk [vmem:[%s2 + $0x8c] sm:$0xf] %vm908, %v815
    %945 = vst.msk [vmem:[%s2 + $0x90] sm:$0xf] %vm908, %v816
    %946 = vst.msk [vmem:[%s2 + $0x94] sm:$0xf] %vm908, %v817
    %947 = vst.msk [vmem:[%s2 + $0x98] sm:$0xf] %vm908, %v818
    %948 = vst.msk [vmem:[%s2 + $0x9c] sm:$0xf] %vm908, %v819
    %949 = vst.msk [vmem:[%s2 + $0xa0] sm:$0xf] %vm908, %v820
    %950 = vst.msk [vmem:[%s2 + $0xa4] sm:$0xf] %vm908, %v821
    %951 = vst.msk [vmem:[%s2 + $0xa8] sm:$0xf] %vm908, %v822
    %952 = vst.msk [vmem:[%s2 + $0xac] sm:$0xf] %vm908, %v823
    %953 = vst.msk [vmem:[%s2 + $0xb0] sm:$0xf] %vm908, %v824
    %954 = vst.msk [vmem:[%s2 + $0xb4] sm:$0xf] %vm908, %v825
    %955 = vst.msk [vmem:[%s2 + $0xb8] sm:$0xf] %vm908, %v826
    %956 = vst.msk [vmem:[%s2 + $0xbc] sm:$0xf] %vm908, %v827
    %957 = vst.msk [vmem:[%s2 + $0xc0] sm:$0xf] %vm908, %v828
    %958 = vst.msk [vmem:[%s2 + $0xc4] sm:$0xf] %vm908, %v829
    %959 = vst.msk [vmem:[%s2 + $0xc8] sm:$0xf] %vm908, %v830
    %960 = vst.msk [vmem:[%s2 + $0xcc] sm:$0xf] %vm908, %v831
    %961 = vst.msk [vmem:[%s2 + $0xd0] sm:$0xf] %vm908, %v832
    %962 = vst.msk [vmem:[%s2 + $0xd4] sm:$0xf] %vm908, %v833
    %963 = vst.msk [vmem:[%s2 + $0xd8] sm:$0xf] %vm908, %v834
    %964 = vst.msk [vmem:[%s2 + $0xdc] sm:$0xf] %vm908, %v835
    %965 = vst.msk [vmem:[%s2 + $0xe0] sm:$0xf] %vm908, %v836
    %966 = vst.msk [vmem:[%s2 + $0xe4] sm:$0xf] %vm908, %v837
    %967 = vst.msk [vmem:[%s2 + $0xe8] sm:$0xf] %vm908, %v838
    %968 = vst.msk [vmem:[%s2 + $0xec] sm:$0xf] %vm908, %v839
    %969 = vst.msk [vmem:[%s2 + $0xf0] sm:$0xf] %vm908, %v840
    %970 = vst.msk [vmem:[%s2 + $0xf4] sm:$0xf] %vm908, %v841
    %971 = vst.msk [vmem:[%s2 + $0xf8] sm:$0xf] %vm908, %v842
    %972 = vst.msk [vmem:[%s2 + $0xfc] sm:$0xf] %vm908, %v843
    %vm973 = vcmask 64512
    %v974 = vsel %vm973, %v398, 0.0
    %v975 = vsel %vm973, %v401, 0.0
    %v976 = vadd.f32 %v974, %v975
    %v977 = vsel %vm973, %v406, 0.0
    %v978 = vadd.f32 %v976, %v977
    %v979 = vsel %vm973, %v409, 0.0
    %v980 = vadd.f32 %v978, %v979
    %v981 = vsel %vm973, %v414, 0.0
    %v982 = vadd.f32 %v980, %v981
    %v983 = vsel %vm973, %v417, 0.0
    %v984 = vadd.f32 %v982, %v983
    %v985 = vsel %vm973, %v422, 0.0
    %v986 = vadd.f32 %v984, %v985
    %v987 = vsel %vm973, %v425, 0.0
    %v988 = vadd.f32 %v986, %v987
    %v989 = vsel %vm973, %v430, 0.0
    %v990 = vadd.f32 %v988, %v989
    %v991 = vsel %vm973, %v433, 0.0
    %v992 = vadd.f32 %v990, %v991
    %v993 = vsel %vm973, %v438, 0.0
    %v994 = vadd.f32 %v992, %v993
    %v995 = vsel %vm973, %v441, 0.0
    %v996 = vadd.f32 %v994, %v995
    %v997 = vsel %vm973, %v446, 0.0
    %v998 = vadd.f32 %v996, %v997
    %v999 = vsel %vm973, %v449, 0.0
    %v1000 = vadd.f32 %v998, %v999
    %v1001 = vsel %vm973, %v454, 0.0
    %v1002 = vadd.f32 %v1000, %v1001
    %v1003 = vsel %vm973, %v457, 0.0
    %v1004 = vadd.f32 %v1002, %v1003
    %v1005 = vsel %vm973, %v462, 0.0
    %v1006 = vadd.f32 %v1004, %v1005
    %v1007 = vsel %vm973, %v465, 0.0
    %v1008 = vadd.f32 %v1006, %v1007
    %v1009 = vsel %vm973, %v470, 0.0
    %v1010 = vadd.f32 %v1008, %v1009
    %v1011 = vsel %vm973, %v473, 0.0
    %v1012 = vadd.f32 %v1010, %v1011
    %v1013 = vsel %vm973, %v478, 0.0
    %v1014 = vadd.f32 %v1012, %v1013
    %v1015 = vsel %vm973, %v481, 0.0
    %v1016 = vadd.f32 %v1014, %v1015
    %v1017 = vsel %vm973, %v486, 0.0
    %v1018 = vadd.f32 %v1016, %v1017
    %v1019 = vsel %vm973, %v489, 0.0
    %v1020 = vadd.f32 %v1018, %v1019
    %v1021 = vsel %vm973, %v494, 0.0
    %v1022 = vadd.f32 %v1020, %v1021
    %v1023 = vsel %vm973, %v497, 0.0
    %v1024 = vadd.f32 %v1022, %v1023
    %v1025 = vsel %vm973, %v502, 0.0
    %v1026 = vadd.f32 %v1024, %v1025
    %v1027 = vsel %vm973, %v505, 0.0
    %v1028 = vadd.f32 %v1026, %v1027
    %v1029 = vsel %vm973, %v510, 0.0
    %v1030 = vadd.f32 %v1028, %v1029
    %v1031 = vsel %vm973, %v513, 0.0
    %v1032 = vadd.f32 %v1030, %v1031
    %v1033 = vsel %vm973, %v518, 0.0
    %v1034 = vadd.f32 %v1032, %v1033
    %v1035 = vsel %vm973, %v521, 0.0
    %v1036 = vadd.f32 %v1034, %v1035
    %v1037 = vsel %vm973, %v526, 0.0
    %v1038 = vadd.f32 %v1036, %v1037
    %v1039 = vsel %vm973, %v529, 0.0
    %v1040 = vadd.f32 %v1038, %v1039
    %v1041 = vsel %vm973, %v534, 0.0
    %v1042 = vadd.f32 %v1040, %v1041
    %v1043 = vsel %vm973, %v537, 0.0
    %v1044 = vadd.f32 %v1042, %v1043
    %v1045 = vsel %vm973, %v542, 0.0
    %v1046 = vadd.f32 %v1044, %v1045
    %v1047 = vsel %vm973, %v545, 0.0
    %v1048 = vadd.f32 %v1046, %v1047
    %v1049 = vsel %vm973, %v550, 0.0
    %v1050 = vadd.f32 %v1048, %v1049
    %v1051 = vsel %vm973, %v553, 0.0
    %v1052 = vadd.f32 %v1050, %v1051
    %v1053 = vsel %vm973, %v558, 0.0
    %v1054 = vadd.f32 %v1052, %v1053
    %v1055 = vsel %vm973, %v561, 0.0
    %v1056 = vadd.f32 %v1054, %v1055
    %v1057 = vsel %vm973, %v566, 0.0
    %v1058 = vadd.f32 %v1056, %v1057
    %v1059 = vsel %vm973, %v569, 0.0
    %v1060 = vadd.f32 %v1058, %v1059
    %v1061 = vsel %vm973, %v574, 0.0
    %v1062 = vadd.f32 %v1060, %v1061
    %v1063 = vsel %vm973, %v577, 0.0
    %v1064 = vadd.f32 %v1062, %v1063
    %v1065 = vsel %vm973, %v582, 0.0
    %v1066 = vadd.f32 %v1064, %v1065
    %v1067 = vsel %vm973, %v585, 0.0
    %v1068 = vadd.f32 %v1066, %v1067
    %v1069 = vsel %vm973, %v590, 0.0
    %v1070 = vadd.f32 %v1068, %v1069
    %v1071 = vsel %vm973, %v593, 0.0
    %v1072 = vadd.f32 %v1070, %v1071
    %v1073 = vsel %vm973, %v598, 0.0
    %v1074 = vadd.f32 %v1072, %v1073
    %v1075 = vsel %vm973, %v601, 0.0
    %v1076 = vadd.f32 %v1074, %v1075
    %v1077 = vsel %vm973, %v606, 0.0
    %v1078 = vadd.f32 %v1076, %v1077
    %v1079 = vsel %vm973, %v609, 0.0
    %v1080 = vadd.f32 %v1078, %v1079
    %v1081 = vsel %vm973, %v614, 0.0
    %v1082 = vadd.f32 %v1080, %v1081
    %v1083 = vsel %vm973, %v617, 0.0
    %v1084 = vadd.f32 %v1082, %v1083
    %v1085 = vsel %vm973, %v622, 0.0
    %v1086 = vadd.f32 %v1084, %v1085
    %v1087 = vsel %vm973, %v625, 0.0
    %v1088 = vadd.f32 %v1086, %v1087
    %v1089 = vsel %vm973, %v630, 0.0
    %v1090 = vadd.f32 %v1088, %v1089
    %v1091 = vsel %vm973, %v633, 0.0
    %v1092 = vadd.f32 %v1090, %v1091
    %v1093 = vsel %vm973, %v638, 0.0
    %v1094 = vadd.f32 %v1092, %v1093
    %v1095 = vsel %vm973, %v641, 0.0
    %v1096 = vadd.f32 %v1094, %v1095
    %v1097 = vsel %vm973, %v646, 0.0
    %v1098 = vadd.f32 %v1096, %v1097
    %v1099 = vsel %vm973, %v649, 0.0
    %v1100 = vadd.f32 %v1098, %v1099
    %v1101 = vrot.slane %v1100, 4
    %v1102 = vadd.f32 %v1100, %v1101
    %v1103 = vrot.slane %v1102, 2
    %v1104 = vadd.f32 %v1102, %v1103
    %v1105 = vrot.slane %v1104, 1
    %v1106 = vadd.f32 %v1104, %v1105
    %vm1107 = vcmask 57344
    %1108 = vst.msk [vmem:[#allocation7] sm:$0x1] %vm1107, %v1106
    %v1109 = vmul.f32 %v398, %v398
    %v1110 = vmul.f32 %v401, %v401
    %v1111 = vmul.f32 %v406, %v406
    %v1112 = vmul.f32 %v409, %v409
    %v1113 = vmul.f32 %v414, %v414
    %v1114 = vmul.f32 %v417, %v417
    %v1115 = vmul.f32 %v422, %v422
    %v1116 = vmul.f32 %v425, %v425
    %v1117 = vmul.f32 %v430, %v430
    %v1118 = vmul.f32 %v433, %v433
    %v1119 = vmul.f32 %v438, %v438
    %v1120 = vmul.f32 %v441, %v441
    %v1121 = vmul.f32 %v446, %v446
    %v1122 = vmul.f32 %v449, %v449
    %v1123 = vmul.f32 %v454, %v454
    %v1124 = vmul.f32 %v457, %v457
    %v1125 = vmul.f32 %v462, %v462
    %v1126 = vmul.f32 %v465, %v465
    %v1127 = vmul.f32 %v470, %v470
    %v1128 = vmul.f32 %v473, %v473
    %v1129 = vmul.f32 %v478, %v478
    %v1130 = vmul.f32 %v481, %v481
    %v1131 = vmul.f32 %v486, %v486
    %v1132 = vmul.f32 %v489, %v489
    %v1133 = vmul.f32 %v494, %v494
    %v1134 = vmul.f32 %v497, %v497
    %v1135 = vmul.f32 %v502, %v502
    %v1136 = vmul.f32 %v505, %v505
    %v1137 = vmul.f32 %v510, %v510
    %v1138 = vmul.f32 %v513, %v513
    %v1139 = vmul.f32 %v518, %v518
    %v1140 = vmul.f32 %v521, %v521
    %v1141 = vmul.f32 %v526, %v526
    %v1142 = vmul.f32 %v529, %v529
    %v1143 = vmul.f32 %v534, %v534
    %v1144 = vmul.f32 %v537, %v537
    %v1145 = vmul.f32 %v542, %v542
    %v1146 = vmul.f32 %v545, %v545
    %v1147 = vmul.f32 %v550, %v550
    %v1148 = vmul.f32 %v553, %v553
    %v1149 = vmul.f32 %v558, %v558
    %v1150 = vmul.f32 %v561, %v561
    %v1151 = vmul.f32 %v566, %v566
    %v1152 = vmul.f32 %v569, %v569
    %v1153 = vmul.f32 %v574, %v574
    %v1154 = vmul.f32 %v577, %v577
    %v1155 = vmul.f32 %v582, %v582
    %v1156 = vmul.f32 %v585, %v585
    %v1157 = vmul.f32 %v590, %v590
    %v1158 = vmul.f32 %v593, %v593
    %v1159 = vmul.f32 %v598, %v598
    %v1160 = vmul.f32 %v601, %v601
    %v1161 = vmul.f32 %v606, %v606
    %v1162 = vmul.f32 %v609, %v609
    %v1163 = vmul.f32 %v614, %v614
    %v1164 = vmul.f32 %v617, %v617
    %v1165 = vmul.f32 %v622, %v622
    %v1166 = vmul.f32 %v625, %v625
    %v1167 = vmul.f32 %v630, %v630
    %v1168 = vmul.f32 %v633, %v633
    %v1169 = vmul.f32 %v638, %v638
    %v1170 = vmul.f32 %v641, %v641
    %v1171 = vmul.f32 %v646, %v646
    %v1172 = vmul.f32 %v649, %v649
    %v1173 = vsel %vm973, %v1109, 0.0
    %v1174 = vsel %vm973, %v1110, 0.0
    %v1175 = vadd.f32 %v1173, %v1174
    %v1176 = vsel %vm973, %v1111, 0.0
    %v1177 = vadd.f32 %v1175, %v1176
    %v1178 = vsel %vm973, %v1112, 0.0
    %v1179 = vadd.f32 %v1177, %v1178
    %v1180 = vsel %vm973, %v1113, 0.0
    %v1181 = vadd.f32 %v1179, %v1180
    %v1182 = vsel %vm973, %v1114, 0.0
    %v1183 = vadd.f32 %v1181, %v1182
    %v1184 = vsel %vm973, %v1115, 0.0
    %v1185 = vadd.f32 %v1183, %v1184
    %v1186 = vsel %vm973, %v1116, 0.0
    %v1187 = vadd.f32 %v1185, %v1186
    %v1188 = vsel %vm973, %v1117, 0.0
    %v1189 = vadd.f32 %v1187, %v1188
    %v1190 = vsel %vm973, %v1118, 0.0
    %v1191 = vadd.f32 %v1189, %v1190
    %v1192 = vsel %vm973, %v1119, 0.0
    %v1193 = vadd.f32 %v1191, %v1192
    %v1194 = vsel %vm973, %v1120, 0.0
    %v1195 = vadd.f32 %v1193, %v1194
    %v1196 = vsel %vm973, %v1121, 0.0
    %v1197 = vadd.f32 %v1195, %v1196
    %v1198 = vsel %vm973, %v1122, 0.0
    %v1199 = vadd.f32 %v1197, %v1198
    %v1200 = vsel %vm973, %v1123, 0.0
    %v1201 = vadd.f32 %v1199, %v1200
    %v1202 = vsel %vm973, %v1124, 0.0
    %v1203 = vadd.f32 %v1201, %v1202
    %v1204 = vsel %vm973, %v1125, 0.0
    %v1205 = vadd.f32 %v1203, %v1204
    %v1206 = vsel %vm973, %v1126, 0.0
    %v1207 = vadd.f32 %v1205, %v1206
    %v1208 = vsel %vm973, %v1127, 0.0
    %v1209 = vadd.f32 %v1207, %v1208
    %v1210 = vsel %vm973, %v1128, 0.0
    %v1211 = vadd.f32 %v1209, %v1210
    %v1212 = vsel %vm973, %v1129, 0.0
    %v1213 = vadd.f32 %v1211, %v1212
    %v1214 = vsel %vm973, %v1130, 0.0
    %v1215 = vadd.f32 %v1213, %v1214
    %v1216 = vsel %vm973, %v1131, 0.0
    %v1217 = vadd.f32 %v1215, %v1216
    %v1218 = vsel %vm973, %v1132, 0.0
    %v1219 = vadd.f32 %v1217, %v1218
    %v1220 = vsel %vm973, %v1133, 0.0
    %v1221 = vadd.f32 %v1219, %v1220
    %v1222 = vsel %vm973, %v1134, 0.0
    %v1223 = vadd.f32 %v1221, %v1222
    %v1224 = vsel %vm973, %v1135, 0.0
    %v1225 = vadd.f32 %v1223, %v1224
    %v1226 = vsel %vm973, %v1136, 0.0
    %v1227 = vadd.f32 %v1225, %v1226
    %v1228 = vsel %vm973, %v1137, 0.0
    %v1229 = vadd.f32 %v1227, %v1228
    %v1230 = vsel %vm973, %v1138, 0.0
    %v1231 = vadd.f32 %v1229, %v1230
    %v1232 = vsel %vm973, %v1139, 0.0
    %v1233 = vadd.f32 %v1231, %v1232
    %v1234 = vsel %vm973, %v1140, 0.0
    %v1235 = vadd.f32 %v1233, %v1234
    %v1236 = vsel %vm973, %v1141, 0.0
    %v1237 = vadd.f32 %v1235, %v1236
    %v1238 = vsel %vm973, %v1142, 0.0
    %v1239 = vadd.f32 %v1237, %v1238
    %v1240 = vsel %vm973, %v1143, 0.0
    %v1241 = vadd.f32 %v1239, %v1240
    %v1242 = vsel %vm973, %v1144, 0.0
    %v1243 = vadd.f32 %v1241, %v1242
    %v1244 = vsel %vm973, %v1145, 0.0
    %v1245 = vadd.f32 %v1243, %v1244
    %v1246 = vsel %vm973, %v1146, 0.0
    %v1247 = vadd.f32 %v1245, %v1246
    %v1248 = vsel %vm973, %v1147, 0.0
    %v1249 = vadd.f32 %v1247, %v1248
    %v1250 = vsel %vm973, %v1148, 0.0
    %v1251 = vadd.f32 %v1249, %v1250
    %v1252 = vsel %vm973, %v1149, 0.0
    %v1253 = vadd.f32 %v1251, %v1252
    %v1254 = vsel %vm973, %v1150, 0.0
    %v1255 = vadd.f32 %v1253, %v1254
    %v1256 = vsel %vm973, %v1151, 0.0
    %v1257 = vadd.f32 %v1255, %v1256
    %v1258 = vsel %vm973, %v1152, 0.0
    %v1259 = vadd.f32 %v1257, %v1258
    %v1260 = vsel %vm973, %v1153, 0.0
    %v1261 = vadd.f32 %v1259, %v1260
    %v1262 = vsel %vm973, %v1154, 0.0
    %v1263 = vadd.f32 %v1261, %v1262
    %v1264 = vsel %vm973, %v1155, 0.0
    %v1265 = vadd.f32 %v1263, %v1264
    %v1266 = vsel %vm973, %v1156, 0.0
    %v1267 = vadd.f32 %v1265, %v1266
    %v1268 = vsel %vm973, %v1157, 0.0
    %v1269 = vadd.f32 %v1267, %v1268
    %v1270 = vsel %vm973, %v1158, 0.0
    %v1271 = vadd.f32 %v1269, %v1270
    %v1272 = vsel %vm973, %v1159, 0.0
    %v1273 = vadd.f32 %v1271, %v1272
    %v1274 = vsel %vm973, %v1160, 0.0
    %v1275 = vadd.f32 %v1273, %v1274
    %v1276 = vsel %vm973, %v1161, 0.0
    %v1277 = vadd.f32 %v1275, %v1276
    %v1278 = vsel %vm973, %v1162, 0.0
    %v1279 = vadd.f32 %v1277, %v1278
    %v1280 = vsel %vm973, %v1163, 0.0
    %v1281 = vadd.f32 %v1279, %v1280
    %v1282 = vsel %vm973, %v1164, 0.0
    %v1283 = vadd.f32 %v1281, %v1282
    %v1284 = vsel %vm973, %v1165, 0.0
    %v1285 = vadd.f32 %v1283, %v1284
    %v1286 = vsel %vm973, %v1166, 0.0
    %v1287 = vadd.f32 %v1285, %v1286
    %v1288 = vsel %vm973, %v1167, 0.0
    %v1289 = vadd.f32 %v1287, %v1288
    %v1290 = vsel %vm973, %v1168, 0.0
    %v1291 = vadd.f32 %v1289, %v1290
    %v1292 = vsel %vm973, %v1169, 0.0
    %v1293 = vadd.f32 %v1291, %v1292
    %v1294 = vsel %vm973, %v1170, 0.0
    %v1295 = vadd.f32 %v1293, %v1294
    %v1296 = vsel %vm973, %v1171, 0.0
    %v1297 = vadd.f32 %v1295, %v1296
    %v1298 = vsel %vm973, %v1172, 0.0
    %v1299 = vadd.f32 %v1297, %v1298
    %v1300 = vrot.slane %v1299, 4
    %v1301 = vadd.f32 %v1299, %v1300
    %v1302 = vrot.slane %v1301, 2
    %v1303 = vadd.f32 %v1301, %v1302
    %v1304 = vrot.slane %v1303, 1
    %v1305 = vadd.f32 %v1303, %v1304
    %1306 = vst.msk [vmem:[#allocation7 + $0x1] sm:$0x1] %vm1107, %v1305
    // Predicated region
    $region18: #{tpu_custom_call.1} parent=1 // pred_check
      _
    $region19: #{tpu_custom_call.1} parent=1 // pred_check_branch
      %1308 = sbr.rel (0) target = $region21
    $region20: #{tpu_custom_call.1} parent=1 // pred_region
      _
    $region21: #{tpu_custom_call.1} parent=1 // pred_fallthru
      _
    // Predicated region
    $region22: #{tpu_custom_call.1} parent=1 // pred_check
      _
    $region23: #{tpu_custom_call.1} parent=1 // pred_check_branch
      %1310 = sbr.rel (0) target = $region25
    $region24: #{tpu_custom_call.1} parent=1 // pred_region
      %s1312 = ssub.s32 32, 32
      %1313 = vsyncadd [#allocation4], %s1312
      %s1315 = sshll.u32 [#allocation7], 4
      %s1316 = int_to_ptr.vmem [resolvable:$true] %s1315
      %1318 = dma.vmem_to_hbm [thread:$0]  %s1316, 32, %s3, [#allocation4]
    $region25: #{tpu_custom_call.1} parent=1 // pred_fallthru
      _
    // Predicated region
    $region26: #{tpu_custom_call.1} parent=1 // pred_check
      _
    $region27: #{tpu_custom_call.1} parent=1 // pred_check_branch
      %1320 = sbr.rel (0) target = $region29
    $region28: #{tpu_custom_call.1} parent=1 // pred_region
      _
    $region29: #{tpu_custom_call.1} parent=1 // pred_fallthru
      _
    // Predicated region
    $region30: #{tpu_custom_call.1} parent=1 // pred_check
      _
    $region31: #{tpu_custom_call.1} parent=1 // pred_check_branch
      %1322 = sbr.rel (0) target = $region33
    $region32: #{tpu_custom_call.1} parent=1 // pred_region
      %1323 = dma.done [#allocation4], 32
    $region33: #{tpu_custom_call.1} parent=1 // pred_fallthru
      _
    %1324 = vsyncpa [#allocation3], 1
    %1325 = vsyncpa [#allocation6], 1
    %1326 = vsyncpa [#allocation4], 1

</llo_original>
